<compile_context>
chip_gen: v7x
topology: tpu7x:2x2x1
jax: 0.10.0
libtpu: 0.0.40
codegen_flags: <defaults>
</compile_context>

<pallas_src>
import math
from functools import partial

import jax
import jax.numpy as jnp
from jax.experimental import pallas as pl
from jax.experimental.pallas import tpu as pltpu


def _pe_add_kernel(x_ref, pe_ref, o_ref, *, batch: int, model_dim: int):
    # x_ref / o_ref : (TS, B*D) fully dense tiles in VMEM.
    # pe_ref        : (TS_pe, D) tile in VMEM, TS_pe >= TS (== TS in the common case).
    rows = x_ref.shape[0]
    pe = pe_ref[0:rows, :]                       # identity slice when TS_pe == TS
    # Broadcast pe over the batch axis by adding it to each width-D lane slab.
    # `batch` is a Python int -> static unroll; slabs are lane-aligned when D % 128 == 0.
    for b in range(batch):
        sl = slice(b * model_dim, (b + 1) * model_dim)
        o_ref[:, sl] = x_ref[:, sl] + pe


def make_positional_encoding(model_dim: int, max_seq_len: int = 5000,
                             dtype=jnp.float32) -> jnp.ndarray:
    """Build the pe buffer exactly like the PyTorch __init__ (shape [L, 1, D])."""
    if model_dim % 2 != 0:
        # Same latent restriction as the PyTorch original (pe[:, 1::2] assignment fails).
        raise ValueError("model_dim must be even for sin/cos positional encoding")
    position = jnp.arange(max_seq_len, dtype=jnp.float32)[:, None]          # (L, 1)
    div_term = jnp.exp(jnp.arange(0, model_dim, 2, dtype=jnp.float32)
                       * (-math.log(10000.0) / model_dim))                  # (D/2,)
    angles = position * div_term                                            # (L, D/2)
    pe = jnp.zeros((max_seq_len, model_dim), dtype=jnp.float32)
    pe = pe.at[:, 0::2].set(jnp.sin(angles))
    pe = pe.at[:, 1::2].set(jnp.cos(angles))
    return pe[:, None, :].astype(dtype)                                     # (L, 1, D)


def _default_vmem_budget_bytes() -> int:
    # Budget for the six double-buffered tiles (2x x, 2x out, 2x pe).  Derived per TPU
    # generation; the pallas_call also raises vmem_limit_bytes to 32 MiB so this budget
    # is legal on v5e (16 MiB default scoped VMEM) as well as v6e/v7x.
    try:
        cap = pltpu.get_tpu_info().vmem_capacity_bytes   # 128 MiB v5e/v6e, 64 MiB v7x
        if cap:
            return min(int(cap) // 3, 24 * 1024 * 1024)
    except Exception:
        pass
    return 16 * 1024 * 1024


def _choose_seq_tile(seq_len: int, row_bytes: int, vmem_budget_bytes: int) -> int:
    """Largest seq tile whose double-buffered working set fits the budget, capped so the
    grid keeps >= ~4 steps (megacore sharding on v7x + DMA/compute overlap)."""
    ts = max(8, int(vmem_budget_bytes) // max(1, row_bytes))
    ts = min(ts, max(8, pl.cdiv(seq_len, 4)))
    ts = max(8, (ts // 8) * 8)                  # sublane-aligned second-minor block dim
    return min(ts, seq_len)


def positional_encoding_forward(x: jnp.ndarray, pe: jnp.ndarray, *,
                                seq_tile: int | None = None,
                                vmem_budget_bytes: int | None = None) -> jnp.ndarray:
    """x: [seq_len, batch, model_dim]; pe: [max_seq_len, 1, model_dim] -> x + pe[:seq_len]."""
    seq_len, batch, model_dim = x.shape
    max_seq_len, pe_one, pe_dim = pe.shape
    if pe_one != 1 or pe_dim != model_dim:
        raise ValueError(f"pe shape {pe.shape} incompatible with x shape {x.shape}")
    if seq_len > max_seq_len:
        raise ValueError(f"seq_len={seq_len} exceeds max_seq_len={max_seq_len}")

    if pe.dtype != x.dtype:          # prefer building pe in x.dtype up front (halves pe stream for bf16)
        pe = pe.astype(x.dtype)

    # Dense 2-D views: sublanes = seq rows (multiple of 8), lanes = B*D / D.
    width = batch * model_dim
    x2 = x.reshape(seq_len, width)               # contiguous dim-merge (no transpose)
    pe2 = pe.reshape(max_seq_len, model_dim)     # [L, 1, D] -> [L, D]

    itemsize = x.dtype.itemsize
    # Double-buffered bytes per seq row: 2x x-tile + 2x out-tile (width) + 2x pe-tile (D).
    row_bytes = (4 * width + 2 * model_dim) * itemsize
    budget = vmem_budget_bytes if vmem_budget_bytes is not None else _default_vmem_budget_bytes()

    ts = seq_tile if seq_tile is not None else _choose_seq_tile(seq_len, row_bytes, budget)
    ts = max(1, min(int(ts), seq_len))
    if ts != seq_len and ts % 8 != 0:            # keep x/out block sublane dim layout-legal
        ts = min(max(8, (ts // 8) * 8), seq_len)
    # pe block's second-minor dim must also be a multiple of 8 (or the full max_seq_len).
    pe_ts = ts if (ts % 8 == 0 or ts == max_seq_len) else min(8, max_seq_len)

    grid = (pl.cdiv(seq_len, ts),)
    kernel = partial(_pe_add_kernel, batch=batch, model_dim=model_dim)

    out2 = pl.pallas_call(
        kernel,
        out_shape=jax.ShapeDtypeStruct((seq_len, width), x.dtype),
        grid=grid,
        in_specs=[
            pl.BlockSpec((ts, width), lambda i: (i, 0)),          # x tile, fully dense
            pl.BlockSpec((pe_ts, model_dim), lambda i: (i, 0)),   # pe tile, one fetch per seq tile
        ],
        out_specs=pl.BlockSpec((ts, width), lambda i: (i, 0)),
        compiler_params=pltpu.CompilerParams(
            dimension_semantics=("parallel",),        # seq tiles independent -> megacore on v7x
            vmem_limit_bytes=32 * 1024 * 1024,        # explicit so big tiles are legal on v5e too
        ),
    )(x2, pe2)
    return out2.reshape(seq_len, batch, model_dim)


if __name__ == "__main__":
    # Small but lane-dense demo shapes: D = 128 keeps every lane slab aligned/unmasked.
    seq_len, batch, model_dim = 64, 2, 128
    max_seq_len = 128

    key = jax.random.PRNGKey(0)
    x = jax.random.normal(key, (seq_len, batch, model_dim), dtype=jnp.float32)
    pe = make_positional_encoding(model_dim, max_seq_len, dtype=jnp.float32)

    fwd = jax.jit(positional_encoding_forward,
                  static_argnames=("seq_tile", "vmem_budget_bytes"))

    # Forced 4-step grid exercises the double-buffered pipeline.
    out = jax.block_until_ready(fwd(x, pe, seq_tile=16))
    # Auto-derived tile (also picks a multi-step grid at these shapes).
    out_auto = jax.block_until_ready(fwd(x, pe))

    # Reference in plain JAX (exact same precomputed pe buffer, broadcast over batch).
    ref = x + pe[:seq_len]
    assert out.shape == (seq_len, batch, model_dim)
    assert jnp.allclose(out, ref, atol=1e-6), "mismatch vs reference (forced tile)"
    assert jnp.allclose(out_auto, ref, atol=1e-6), "mismatch vs reference (auto tile)"

    print("KERNEL_OK")
</pallas_src>

<mosaic_0001>
module attributes {stable_mosaic.version = 11 : i64} {
  func.func @_pe_add_kernel(%arg0: i32, %arg1: memref<16x256xf32, #tpu.memory_space<vmem>>, %arg2: memref<16x128xf32, #tpu.memory_space<vmem>>, %arg3: memref<16x256xf32, #tpu.memory_space<vmem>>) attributes {dimension_semantics = [#tpu.dimension_semantics<parallel>], iteration_bounds = array<i64: 4>, scalar_prefetch = 0 : i64, scratch_operands = 0 : i64, tpu.core_type = #tpu.core_type<tc>, window_params = [{transform_indices = @transform_0, window_bounds = array<i64: 16, 256>}, {transform_indices = @transform_1, window_bounds = array<i64: 16, 128>}, {transform_indices = @transform_2, window_bounds = array<i64: 16, 256>}]} {
    %c0 = arith.constant 0 : index
    %c0_0 = arith.constant 0 : index
    %0 = vector.load %arg2[%c0, %c0_0] : memref<16x128xf32, #tpu.memory_space<vmem>>, vector<16x128xf32>
    %c0_1 = arith.constant 0 : index
    %c0_2 = arith.constant 0 : index
    %1 = vector.load %arg1[%c0_1, %c0_2] : memref<16x256xf32, #tpu.memory_space<vmem>>, vector<16x128xf32>
    %2 = arith.addf %1, %0 : vector<16x128xf32>
    %c0_3 = arith.constant 0 : index
    %c0_4 = arith.constant 0 : index
    %3 = vector.load %arg3[%c0_3, %c0_4] : memref<16x256xf32, #tpu.memory_space<vmem>>, vector<16x128xf32>
    tpu.vector_store %arg3[%c0_3, %c0_4], %2 {strides = array<i32>} : memref<16x256xf32, #tpu.memory_space<vmem>>, vector<16x128xf32>,
    %c0_5 = arith.constant 0 : index
    %c128 = arith.constant 128 : index
    %4 = vector.load %arg1[%c0_5, %c128] : memref<16x256xf32, #tpu.memory_space<vmem>>, vector<16x128xf32>
    %5 = arith.addf %4, %0 : vector<16x128xf32>
    %c0_6 = arith.constant 0 : index
    %c128_7 = arith.constant 128 : index
    %6 = vector.load %arg3[%c0_6, %c128_7] : memref<16x256xf32, #tpu.memory_space<vmem>>, vector<16x128xf32>
    tpu.vector_store %arg3[%c0_6, %c128_7], %5 {strides = array<i32>} : memref<16x256xf32, #tpu.memory_space<vmem>>, vector<16x128xf32>,
    return
  }
  func.func @transform_0(%arg0: i32) -> (i32, i32) {
    %c0_i32 = arith.constant 0 : i32
    %c0_i32_0 = arith.constant 0 : i32
    return %arg0, %c0_i32 : i32, i32
  }
  func.func @transform_1(%arg0: i32) -> (i32, i32) {
    %c0_i32 = arith.constant 0 : i32
    %c0_i32_0 = arith.constant 0 : i32
    return %arg0, %c0_i32 : i32, i32
  }
  func.func @transform_2(%arg0: i32) -> (i32, i32) {
    %c0_i32 = arith.constant 0 : i32
    %c0_i32_0 = arith.constant 0 : i32
    return %arg0, %c0_i32 : i32, i32
  }
}

</mosaic_0001>

<llo_original>
// kernel: positional_encoding_forward.1
$region0: #{positional_encoding_forward.1}
  #allocation0 [shape = 'u32[]', space=smem, size = 0x4, offset = 0x4, fixed_abs, tag = 'smem constant byte address 0x4 - core index']
  #allocation1 [shape = 'u32[144,128]{1,0:T(1,128)}', space=vmem, size = 0x12000, scoped, tag = 'internal scratch']
  %s0 = inlined_call_operand.vmem [shape: f32[64,256], index: 0, kind: input, shape index: {}]
  %s1 = inlined_call_operand.vmem [shape: f32[128,128], index: 1, kind: input, shape index: {}]
  %s2 = inlined_call_operand.vmem [shape: f32[64,256], index: 2, kind: output, shape index: {}]
  %s3 = sld [smem:[#allocation0]]
  $region41: #{positional_encoding_forward.1} parent=0
    _
  %s5 = ssub.s32 1, %s3
  %s6 = scalar_select 0, %s5, %s3
  loop: start=0, step=1, limit=6
  $region2: #{positional_encoding_forward.1} parent=0 // loop_pre_header
    _
  $region3: #{positional_encoding_forward.1} parent=0 // loop_header
    %s8 = sphi 0, %s12
    %p9 = scmp.ge.s32.totalorder %s8, 6
    %s18 = sphi 0, %s20
    %s21 = sphi 0, %s18
    %s22 = sphi 0, %s21
    %s38 = sphi 0, %s22
    %s44 = sphi 0, %s46
    %s47 = sphi 0, %s44
    %s48 = sphi 0, %s47
    %s64 = sphi 0, %s48
    %s70 = sphi 0, %s72
    %s73 = sphi 0, %s70
    %s74 = sphi 0, %s73
    %s90 = sphi 0, %s74
  $region4: #{positional_encoding_forward.1} parent=0 // loop_header_branch
    %11 = sbr.rel (%p9) target = $region8
  $region5: #{positional_encoding_forward.1} parent=0 // loop_body
    %s13 = ssub.s32 %s8, 1
    %s14 = ssub.s32 %s8, 2
    %s15 = sadd.s32 %s8, 1
    %s16 = ssub.s32 %s8, %s15
    %p17 = scmp.eq.s32.totalorder %s16, 0
    %s19 = sadd.s32 %s18, 1
    %s20 = scalar_select %p17, %s18, %s19
    %p23 = pneg %p17
    %p24 = scmp.eq.s32.totalorder %s8, 3
    %p25 = por %p23, %p24
    %p26 = scmp.ne.s32.totalorder %s18, %s21
    %p27 = scmp.eq.s32.totalorder %s8, 0
    %p28 = por %p26, %p27
    %p29 = scmp.ne.s32.totalorder %s18, %s21
    %p30 = scmp.eq.s32.totalorder %s13, 3
    %p31 = por %p29, %p30
    %p32 = scmp.ne.s32.totalorder %s21, %s22
    %p33 = scmp.eq.s32.totalorder %s13, 0
    %p34 = por %p32, %p33
    %p35 = scmp.ne.s32.totalorder %s21, %s22
    %p36 = scmp.eq.s32.totalorder %s14, 3
    %p37 = por %p35, %p36
    %p39 = scmp.ne.s32.totalorder %s22, %s38
    %p40 = scmp.eq.s32.totalorder %s14, 0
    %p41 = por %p39, %p40
    %s42 = ssub.s32 %s8, %s15
    %p43 = scmp.eq.s32.totalorder %s42, 0
    %s45 = sadd.s32 %s44, 1
    %s46 = scalar_select %p43, %s44, %s45
    %p49 = pneg %p43
    %p50 = scmp.eq.s32.totalorder %s8, 3
    %p51 = por %p49, %p50
    %p52 = scmp.ne.s32.totalorder %s44, %s47
    %p53 = scmp.eq.s32.totalorder %s8, 0
    %p54 = por %p52, %p53
    %p55 = scmp.ne.s32.totalorder %s44, %s47
    %p56 = scmp.eq.s32.totalorder %s13, 3
    %p57 = por %p55, %p56
    %p58 = scmp.ne.s32.totalorder %s47, %s48
    %p59 = scmp.eq.s32.totalorder %s13, 0
    %p60 = por %p58, %p59
    %p61 = scmp.ne.s32.totalorder %s47, %s48
    %p62 = scmp.eq.s32.totalorder %s14, 3
    %p63 = por %p61, %p62
    %p65 = scmp.ne.s32.totalorder %s48, %s64
    %p66 = scmp.eq.s32.totalorder %s14, 0
    %p67 = por %p65, %p66
    %s68 = ssub.s32 %s8, %s15
    %p69 = scmp.eq.s32.totalorder %s68, 0
    %s71 = sadd.s32 %s70, 1
    %s72 = scalar_select %p69, %s70, %s71
    %p75 = pneg %p69
    %p76 = scmp.eq.s32.totalorder %s8, 3
    %p77 = por %p75, %p76
    %p78 = scmp.ne.s32.totalorder %s70, %s73
    %p79 = scmp.eq.s32.totalorder %s8, 0
    %p80 = por %p78, %p79
    %p81 = scmp.ne.s32.totalorder %s70, %s73
    %p82 = scmp.eq.s32.totalorder %s13, 3
    %p83 = por %p81, %p82
    %p84 = scmp.ne.s32.totalorder %s73, %s74
    %p85 = scmp.eq.s32.totalorder %s13, 0
    %p86 = por %p84, %p85
    %p87 = scmp.ne.s32.totalorder %s73, %s74
    %p88 = scmp.eq.s32.totalorder %s14, 3
    %p89 = por %p87, %p88
    %p91 = scmp.ne.s32.totalorder %s74, %s90
    %p92 = scmp.eq.s32.totalorder %s14, 0
    %p93 = por %p91, %p92
    %p94 = scmp.le.s32.totalorder 1, %s8
    %p95 = scmp.lt.s32.totalorder %s8, 5
    %p96 = pnand %p94, %p95
    %p97 = pneg %p96
    // Predicated region
    $region9: #{positional_encoding_forward.1} parent=5 // pred_check
      _
    $region10: #{positional_encoding_forward.1} parent=5 // pred_check_branch
      %99 = sbr.rel (%p96) target = $region12
    $region11: #{positional_encoding_forward.1} parent=5 // pred_region
      %s100 = ssub.s32 %s8, 1
    $region12: #{positional_encoding_forward.1} parent=5 // pred_fallthru
      _
    %p101 = scmp.lt.s32.totalorder %s8, 4
    // Predicated region
    $region13: #{positional_encoding_forward.1} parent=5 // pred_check
      %p102 = pneg %p101
    $region14: #{positional_encoding_forward.1} parent=5 // pred_check_branch
      %104 = sbr.rel (%p102) target = $region16
    $region15: #{positional_encoding_forward.1} parent=5 // pred_region
      // Predicated region
      $region17: #{positional_encoding_forward.1} parent=15 // pred_check
        %p105 = pneg %p28
      $region18: #{positional_encoding_forward.1} parent=15 // pred_check_branch
        %107 = sbr.rel (%p105) target = $region20
      $region19: #{positional_encoding_forward.1} parent=15 // pred_region
        %s108 = smul.u32 2, %s8
        %p109 = scmp.lt.s32.totalorder %s108, 7
        %s110 = scalar_select %p109, %s108, 7
        %s111 = smul.addr %s110, 2
        %s112 = smul.addr %s111, 8
        %s113 = scalar_lea.vmem %s0, %s112
        %s114 = smul.u32 2, %s8
      $region20: #{positional_encoding_forward.1} parent=15 // pred_fallthru
        _
      // Predicated region
      $region21: #{positional_encoding_forward.1} parent=15 // pred_check
        %p115 = pneg %p54
      $region22: #{positional_encoding_forward.1} parent=15 // pred_check_branch
        %117 = sbr.rel (%p115) target = $region24
      $region23: #{positional_encoding_forward.1} parent=15 // pred_region
        %s118 = smul.u32 2, %s8
        %p119 = scmp.lt.s32.totalorder %s118, 15
        %s120 = scalar_select %p119, %s118, 15
        %s121 = smul.addr %s120, 8
        %s122 = scalar_lea.vmem %s1, %s121
        %s123 = smul.u32 2, %s8
      $region24: #{positional_encoding_forward.1} parent=15 // pred_fallthru
        _
    $region16: #{positional_encoding_forward.1} parent=5 // pred_fallthru
      _
    %p124 = scmp.le.s32.totalorder 1, %s8
    %p125 = scmp.lt.s32.totalorder %s8, 5
    %p126 = pnand %p124, %p125
    %p127 = pneg %p126
    // Predicated region
    $region25: #{positional_encoding_forward.1} parent=5 // pred_check
      _
    $region26: #{positional_encoding_forward.1} parent=5 // pred_check_branch
      %129 = sbr.rel (%p126) target = $region28
    $region27: #{positional_encoding_forward.1} parent=5 // pred_region
      %s130 = ssub.s32 %s8, 1
      %s131 = smul.u32 2, %s13
      %p132 = scmp.lt.s32.totalorder %s131, 7
      %s133 = scalar_select %p132, %s131, 7
      %s134 = smul.addr %s133, 2
      %s135 = smul.addr %s134, 8
      %s136 = scalar_lea.vmem %s0, %s135
      %p137 = pneg %p34
      %p138 = pneg %p31
      %s139 = smul.u32 2, %s13
      %p140 = scmp.lt.s32.totalorder %s139, 15
      %s141 = scalar_select %p140, %s139, 15
      %s142 = smul.addr %s141, 8
      %s143 = scalar_lea.vmem %s1, %s142
      %p144 = pneg %p60
      %p145 = pneg %p57
      %p146 = pneg %p86
      %p147 = pneg %p83
      %s148 = smul.u32 2, %s13
      %p149 = scmp.lt.s32.totalorder %s148, 7
      %s150 = scalar_select %p149, %s148, 7
      %s151 = smul.addr %s150, 2
      %s152 = smul.addr %s151, 8
      %s153 = scalar_lea.vmem %s2, %s152
      %s154 = smul.u32 2, %s13
      %p155 = scmp.lt.s32.totalorder %s154, 7
      %s156 = scalar_select %p155, %s154, 7
      %s157 = smul.addr %s156, 2
      %s158 = smul.addr %s157, 8
      %s159 = scalar_lea.vmem %s0, %s158
      %s160 = smul.u32 2, %s13
      %s161 = smul.u32 2, %s13
      %p162 = scmp.lt.s32.totalorder %s161, 15
      %s163 = scalar_select %p162, %s161, 15
      %s164 = smul.addr %s163, 8
      %s165 = scalar_lea.vmem %s1, %s164
      %s166 = smul.u32 2, %s13
      %s167 = smul.u32 2, %s13
      %p168 = scmp.lt.s32.totalorder %s167, 7
      %s169 = scalar_select %p168, %s167, 7
      %s170 = smul.addr %s169, 2
      %s171 = smul.addr %s170, 8
      %s172 = scalar_lea.vmem %s2, %s171
      %s173 = smul.u32 2, %s13
      %v174 = vld [vmem:[%s165] sm:$0xff]
      %v175 = vld [vmem:[%s165 + $0x8] sm:$0xff]
      %v176 = vld [vmem:[%s159] sm:$0xff]
      %v177 = vld [vmem:[%s159 + $0x10] sm:$0xff]
      %v178 = vadd.f32 %v176, %v174
      %v179 = vadd.f32 %v177, %v175
      %180 = vst [vmem:[%s172] sm:$0xff] %v178
      %181 = vst [vmem:[%s172 + $0x10] sm:$0xff] %v179
      %v182 = vld [vmem:[%s159 + $0x8] sm:$0xff]
      %v183 = vld [vmem:[%s159 + $0x18] sm:$0xff]
      %v184 = vadd.f32 %v182, %v174
      %v185 = vadd.f32 %v183, %v175
      %186 = vst [vmem:[%s172 + $0x8] sm:$0xff] %v184
      %187 = vst [vmem:[%s172 + $0x18] sm:$0xff] %v185
      %s188 = smul.u32 2, %s13
      %p189 = scmp.lt.s32.totalorder %s188, 7
      %s190 = scalar_select %p189, %s188, 7
      %s191 = smul.addr %s190, 2
      %s192 = smul.addr %s191, 8
      %s193 = scalar_lea.vmem %s2, %s192
      // Predicated region
      $region29: #{positional_encoding_forward.1} parent=27 // pred_check
        %p194 = pneg %p83
      $region30: #{positional_encoding_forward.1} parent=27 // pred_check_branch
        %196 = sbr.rel (%p194) target = $region32
      $region31: #{positional_encoding_forward.1} parent=27 // pred_region
        %s197 = smul.u32 2, %s13
      $region32: #{positional_encoding_forward.1} parent=27 // pred_fallthru
        _
    $region28: #{positional_encoding_forward.1} parent=5 // pred_fallthru
      _
    %p198 = scmp.le.s32.totalorder 2, %s8
    // Predicated region
    $region33: #{positional_encoding_forward.1} parent=5 // pred_check
      %p199 = pneg %p198
    $region34: #{positional_encoding_forward.1} parent=5 // pred_check_branch
      %201 = sbr.rel (%p199) target = $region36
    $region35: #{positional_encoding_forward.1} parent=5 // pred_region
      %s202 = ssub.s32 %s8, 2
      // Predicated region
      $region37: #{positional_encoding_forward.1} parent=35 // pred_check
        %p203 = pneg %p89
      $region38: #{positional_encoding_forward.1} parent=35 // pred_check_branch
        %205 = sbr.rel (%p203) target = $region40
      $region39: #{positional_encoding_forward.1} parent=35 // pred_region
        %s206 = smul.u32 2, %s14
        %p207 = scmp.lt.s32.totalorder %s206, 7
        %s208 = scalar_select %p207, %s206, 7
        %s209 = smul.addr %s208, 2
        %s210 = smul.addr %s209, 8
        %s211 = scalar_lea.vmem %s2, %s210
      $region40: #{positional_encoding_forward.1} parent=35 // pred_fallthru
        _
    $region36: #{positional_encoding_forward.1} parent=5 // pred_fallthru
      _
  $region6: #{positional_encoding_forward.1} parent=0 // loop_footer
    %s12 = sadd.s32 1, %s8
  $region7: #{positional_encoding_forward.1} parent=0 // loop_footer_branch
    %7 = sbr.rel target = $region3
  $region8: #{positional_encoding_forward.1} parent=0 // loop_exit
    _

</llo_original>
